<compile_context>
chip_gen: v7x
topology: tpu7x:2x2x1
jax: 0.10.0
libtpu: 0.0.40
codegen_flags: <defaults>
</compile_context>

<pallas_src>
import math

import jax
import jax.numpy as jnp
from jax.experimental import pallas as pl
from jax.experimental.pallas import tpu as pltpu

LANE = 128


def _round_up(x, m):
    return (x + m - 1) // m * m


def _fused_mp_kernel(a_ref, x_ref, p_ref, o_ref, acc_ref):
    """Row tile i, contraction tile k:  acc += A[i,k] @ x[k];  o[i] = p'[i] + acc at last k."""
    k = pl.program_id(1)

    @pl.when(k == 0)
    def _():
        acc_ref[...] = jnp.zeros_like(acc_ref)

    acc_ref[...] += jnp.dot(a_ref[...], x_ref[...], preferred_element_type=jnp.float32)

    @pl.when(k == pl.num_programs(1) - 1)
    def _():
        o_ref[...] = (p_ref[...].astype(jnp.float32) + acc_ref[...]).astype(o_ref.dtype)


def la_message_passing_up_attention(p, q, edge_index, att_scores, weight, bias, *,
                                    tm=512, use_bf16=False):
    """Forward of LAMessagePassingUpAttention. Returns (p_new, q)."""
    N, D = q.shape
    out_dtype = p.dtype

    # ---- cheap plain-JAX preprocessing (hoisted out of the kernel) ----------
    # Symmetrization AND the feature-mixing matmul done once here; the kernel
    # only streams the adjacency through the MXU.
    w_sym = (weight + weight.T).astype(jnp.float32)
    x = q.astype(jnp.float32) @ w_sym                      # q @ (W + W^T)

    row, col = edge_index[0], edge_index[1]
    deg = jnp.zeros((N,), jnp.float32).at[col].add(1.0)
    deg_safe = jnp.where(deg > 0, deg, 1.0)
    deg_inv_sqrt = jnp.where(deg > 0, deg_safe ** -0.5, 0.0)
    norm = deg_inv_sqrt[row] * deg_inv_sqrt[col] * att_scores.astype(jnp.float32)

    # ---- padding / tiling ----------------------------------------------------
    d_pad = _round_up(D, LANE)                 # exactly one (or few) 128-lane tiles
    n_pad = _round_up(N, LANE)

    tm = min(tm, n_pad)
    tm = max(LANE, (tm // LANE) * LANE)        # multiple of 128 (bf16/f32 safe)
    if n_pad // tm < 2 and n_pad >= 2 * LANE:
        tm = n_pad // 2                        # keep >= 2 row tiles for v7x's 2 TCs
    n_pad = _round_up(n_pad, tm)
    tk = next(t for t in (512, 256, 128) if n_pad % t == 0)

    adj_dtype = jnp.bfloat16 if use_bf16 else jnp.float32

    # Dense normalized adjacency (scatter-add in f32, single cast after).
    # TODO(synk): for large sparse graphs a CSR/block-sparse layout consumed via
    # PrefetchScalarGridSpec (scalar-prefetched block indices + pl.when skipping
    # all-zero tiles) avoids the O(N^2) dense adjacency; not implemented here.
    adj = (jnp.zeros((n_pad, n_pad), jnp.float32).at[col, row].add(norm)
           ).astype(adj_dtype)

    x_pad = jnp.zeros((n_pad, d_pad), jnp.float32).at[:N, :D].set(x).astype(adj_dtype)
    # Bias folded into p: one fewer input stream and no per-tile broadcast add.
    p_pad = jnp.zeros((n_pad, d_pad), jnp.float32).at[:N, :D].set(
        p.astype(jnp.float32) + bias.astype(jnp.float32)[None, :]).astype(out_dtype)

    grid = (n_pad // tm, n_pad // tk)

    itm = jnp.dtype(adj_dtype).itemsize
    flops = 2 * n_pad * n_pad * d_pad + n_pad * d_pad
    bytes_accessed = (n_pad * n_pad * itm            # A
                      + n_pad * d_pad * itm          # x
                      + 2 * n_pad * d_pad * 4)       # p in + out

    # Per-generation VMEM cap: ~32 MiB on v7x (64 MiB/TC), ~64 MiB on v5e/v6e (128 MiB).
    try:
        vmem_cap = pltpu.get_tpu_info().vmem_capacity_bytes
    except Exception:
        vmem_cap = 64 * 1024 * 1024
    vmem_limit = int(min(max(vmem_cap // 2, 32 * 1024 * 1024), 96 * 1024 * 1024))

    out_pad = pl.pallas_call(
        _fused_mp_kernel,
        out_shape=jax.ShapeDtypeStruct((n_pad, d_pad), out_dtype),
        grid_spec=pltpu.PrefetchScalarGridSpec(
            num_scalar_prefetch=0,
            grid=grid,
            in_specs=[
                pl.BlockSpec((tm, tk), lambda i, k: (i, k)),      # A tile (pipelined)
                pl.BlockSpec((tk, d_pad), lambda i, k: (k, 0)),   # x = q @ W_sym tile
                pl.BlockSpec((tm, d_pad), lambda i, k: (i, 0)),   # p + bias row tile
            ],
            out_specs=pl.BlockSpec((tm, d_pad), lambda i, k: (i, 0)),
            scratch_shapes=[pltpu.VMEM((tm, d_pad), jnp.float32)],   # f32 accumulator
        ),
        compiler_params=pltpu.CompilerParams(
            dimension_semantics=("parallel", "arbitrary"),
            vmem_limit_bytes=vmem_limit,
        ),
        cost_estimate=pl.CostEstimate(
            flops=flops, transcendentals=0, bytes_accessed=bytes_accessed),
        input_output_aliases={2: 0},   # output aliases the (p + bias) buffer
    )(adj, x_pad, p_pad)

    p_new = out_pad[:N, :D]
    return p_new, q


def init_params(key, features):
    """kaiming_uniform_(a=sqrt(5)) on a square weight => U(-1/sqrt(n), 1/sqrt(n));
    the MessagePassing bias is zero-initialized per reset_parameters()."""
    bound = 1.0 / math.sqrt(features)
    weight = jax.random.uniform(key, (features, features), jnp.float32,
                                minval=-bound, maxval=bound)
    bias = jnp.zeros((features,), jnp.float32)
    return weight, bias


if __name__ == "__main__":
    key = jax.random.PRNGKey(0)
    k_p, k_q, k_w, k_r, k_c, k_a = jax.random.split(key, 6)

    num_nodes, hidden, num_edges = 16, 32, 48

    p = jax.random.normal(k_p, (num_nodes, hidden), jnp.float32)
    q = jax.random.normal(k_q, (num_nodes, hidden), jnp.float32)
    row = jax.random.randint(k_r, (num_edges,), 0, num_nodes, dtype=jnp.int32)
    col = jax.random.randint(k_c, (num_edges,), 0, num_nodes, dtype=jnp.int32)
    edge_index = jnp.stack([row, col], axis=0)
    att_scores = jax.random.uniform(k_a, (num_edges,), jnp.float32)

    weight, bias = init_params(k_w, hidden)

    fwd = jax.jit(la_message_passing_up_attention, static_argnames=("tm", "use_bf16"))

    # Default f32 path: must match the PyTorch reference tightly.
    p_new, q_new = fwd(p, q, edge_index, att_scores, weight, bias)
    p_new = jax.block_until_ready(p_new)

    # Plain-JAX reference of the PyTorch forward.
    w_sym = weight + weight.T
    x_lin = q @ w_sym
    deg = jnp.zeros((num_nodes,), jnp.float32).at[col].add(1.0)
    dis = jnp.where(deg > 0, deg ** -0.5, 0.0)
    norm = dis[row] * dis[col] * att_scores
    agg = jnp.zeros((num_nodes, hidden), jnp.float32).at[col].add(norm[:, None] * x_lin[row])
    p_ref = p + agg + bias

    assert p_new.shape == (num_nodes, hidden)
    assert jnp.allclose(p_new, p_ref, atol=1e-4, rtol=1e-4), "p mismatch vs reference"
    assert jnp.array_equal(q_new, q), "q must pass through unchanged"

    # Opt-in bf16 A/x stream (f32 accumulation): looser tolerance by design.
    p_bf16, _ = fwd(p, q, edge_index, att_scores, weight, bias, use_bf16=True)
    p_bf16 = jax.block_until_ready(p_bf16)
    assert jnp.allclose(p_bf16, p_ref, atol=1e-1, rtol=1e-1), "bf16 path mismatch"

    print("KERNEL_OK")
</pallas_src>

<mosaic_0001>
module attributes {stable_mosaic.version = 11 : i64} {
  func.func private @main(%arg0: i32) attributes {dimension_semantics = [#tpu.dimension_semantics<core_parallel>], iteration_bounds = array<i64: 2>, tpu.core_type = #tpu.core_type<sc_scalar_subcore>, window_params = []} {
    return
  }
}

module attributes {stable_mosaic.version = 11 : i64} {
  func.func private @main(%arg0: i32) attributes {dimension_semantics = [#tpu.dimension_semantics<core_parallel>], iteration_bounds = array<i64: 2>, tpu.core_type = #tpu.core_type<sc_scalar_subcore>, window_params = []} {
    return
  }
}

module attributes {stable_mosaic.version = 11 : i64} {
  func.func @_fused_mp_kernel(%arg0: i32, %arg1: i32, %arg2: memref<128x128xf32, #tpu.memory_space<vmem>>, %arg3: memref<128x128xf32, #tpu.memory_space<vmem>>, %arg4: memref<128x128xf32, #tpu.memory_space<vmem>>, %arg5: memref<128x128xf32, #tpu.memory_space<vmem>>, %arg6: memref<128x128xf32, #tpu.memory_space<vmem>>) attributes {dimension_semantics = [#tpu.dimension_semantics<parallel>, #tpu.dimension_semantics<arbitrary>], iteration_bounds = array<i64: 1, 1>, scalar_prefetch = 0 : i64, scratch_operands = 1 : i64, tpu.core_type = #tpu.core_type<tc>, window_params = [{transform_indices = @transform_0, window_bounds = array<i64: 128, 128>}, {transform_indices = @transform_1, window_bounds = array<i64: 128, 128>}, {transform_indices = @transform_2, window_bounds = array<i64: 128, 128>}, {transform_indices = @transform_3, window_bounds = array<i64: 128, 128>}]} {
    %c0_i32 = arith.constant 0 : i32
    %0 = arith.cmpi eq, %arg1, %c0_i32 : i32
    %1 = arith.extui %0 : i1 to i32
    %c0_i32_0 = arith.constant 0 : i32
    %2 = arith.cmpi ne, %1, %c0_i32_0 : i32
    scf.if %2 {
      %cst_10 = arith.constant 0.000000e+00 : f32
      %12 = vector.broadcast %cst_10 : f32 to vector<128x128xf32>
      %c0_11 = arith.constant 0 : index
      %c0_12 = arith.constant 0 : index
      %13 = vector.load %arg6[%c0_11, %c0_12] : memref<128x128xf32, #tpu.memory_space<vmem>>, vector<128x128xf32>
      tpu.vector_store %arg6[%c0_11, %c0_12], %12 {strides = array<i32>} : memref<128x128xf32, #tpu.memory_space<vmem>>, vector<128x128xf32>,
    } else {
    }
    %c0 = arith.constant 0 : index
    %c0_1 = arith.constant 0 : index
    %3 = vector.load %arg6[%c0, %c0_1] : memref<128x128xf32, #tpu.memory_space<vmem>>, vector<128x128xf32>
    %c0_2 = arith.constant 0 : index
    %c0_3 = arith.constant 0 : index
    %4 = vector.load %arg2[%c0_2, %c0_3] : memref<128x128xf32, #tpu.memory_space<vmem>>, vector<128x128xf32>
    %c0_4 = arith.constant 0 : index
    %c0_5 = arith.constant 0 : index
    %5 = vector.load %arg3[%c0_4, %c0_5] : memref<128x128xf32, #tpu.memory_space<vmem>>, vector<128x128xf32>
    %cst = arith.constant dense<0.000000e+00> : vector<128x128xf32>
    %6 = tpu.matmul %4, %5, %cst {dimension_numbers = #tpu.dot_dimension_numbers<[1], [0], [0], [1], [0, 0, 1, 1], [], []>} : vector<128x128xf32>, vector<128x128xf32>, vector<128x128xf32> -> vector<128x128xf32>
    %7 = arith.addf %3, %6 : vector<128x128xf32>
    %c0_6 = arith.constant 0 : index
    %c0_7 = arith.constant 0 : index
    %8 = vector.load %arg6[%c0_6, %c0_7] : memref<128x128xf32, #tpu.memory_space<vmem>>, vector<128x128xf32>
    tpu.vector_store %arg6[%c0_6, %c0_7], %7 {strides = array<i32>} : memref<128x128xf32, #tpu.memory_space<vmem>>, vector<128x128xf32>,
    %c0_i32_8 = arith.constant 0 : i32
    %9 = arith.cmpi eq, %arg1, %c0_i32_8 : i32
    %10 = arith.extui %9 : i1 to i32
    %c0_i32_9 = arith.constant 0 : i32
    %11 = arith.cmpi ne, %10, %c0_i32_9 : i32
    scf.if %11 {
      %c0_10 = arith.constant 0 : index
      %c0_11 = arith.constant 0 : index
      %12 = vector.load %arg4[%c0_10, %c0_11] : memref<128x128xf32, #tpu.memory_space<vmem>>, vector<128x128xf32>
      %c0_12 = arith.constant 0 : index
      %c0_13 = arith.constant 0 : index
      %13 = vector.load %arg6[%c0_12, %c0_13] : memref<128x128xf32, #tpu.memory_space<vmem>>, vector<128x128xf32>
      %14 = arith.addf %12, %13 : vector<128x128xf32>
      %c0_14 = arith.constant 0 : index
      %c0_15 = arith.constant 0 : index
      %15 = vector.load %arg5[%c0_14, %c0_15] : memref<128x128xf32, #tpu.memory_space<vmem>>, vector<128x128xf32>
      tpu.vector_store %arg5[%c0_14, %c0_15], %14 {strides = array<i32>} : memref<128x128xf32, #tpu.memory_space<vmem>>, vector<128x128xf32>,
    } else {
    }
    return
  }
  func.func @transform_0(%arg0: i32, %arg1: i32) -> (i32, i32) {
    %c0_i32 = arith.constant 0 : i32
    return %arg0, %arg1 : i32, i32
  }
  func.func @transform_1(%arg0: i32, %arg1: i32) -> (i32, i32) {
    %c0_i32 = arith.constant 0 : i32
    %c0_i32_0 = arith.constant 0 : i32
    return %arg1, %c0_i32 : i32, i32
  }
  func.func @transform_2(%arg0: i32, %arg1: i32) -> (i32, i32) {
    %c0_i32 = arith.constant 0 : i32
    %c0_i32_0 = arith.constant 0 : i32
    return %arg0, %c0_i32 : i32, i32
  }
  func.func @transform_3(%arg0: i32, %arg1: i32) -> (i32, i32) {
    %c0_i32 = arith.constant 0 : i32
    %c0_i32_0 = arith.constant 0 : i32
    return %arg0, %c0_i32 : i32, i32
  }
}

</mosaic_0001>

<llo_original>
// kernel: la_message_passing_up_attention.1
$region0: #{la_message_passing_up_attention.1}
  #allocation0 [shape = 'u32[]', space=smem, size = 0x4, offset = 0x4, fixed_abs, tag = 'smem constant byte address 0x4 - core index']
  #allocation1 [shape = 'u32[144,128]{1,0:T(1,128)}', space=vmem, size = 0x12000, scoped, tag = 'internal scratch']
  #allocation2 [shape = 'f32[128,128]{1,0:T(8,128)}', space=vmem, size = 0x10000, scoped, tag = 'scratch operand']
  %s0 = inlined_call_operand.hbm [shape: f32[128,128], index: 0, kind: input, shape index: {}]
  %s1 = inlined_call_operand.vmem [shape: f32[128,128], index: 1, kind: input, shape index: {}]
  %s2 = inlined_call_operand.vmem [shape: f32[128,128], index: 2, kind: input, shape index: {}, may-alias: {2,3}]
  %s3 = inlined_call_operand.vmem [shape: f32[128,128], index: 3, kind: output, shape index: {}, may-alias: {2,3}]
  %s4 = sld [smem:[#allocation0]]
  $region34: #{la_message_passing_up_attention.1} parent=0
    _
  %s6 = ssub.s32 1, %s4
  %s7 = scalar_select 0, %s6, %s4
  $region1: #{la_message_passing_up_attention.1} parent=0
    #allocation3 [shape = 'u8[65536]{0}', space=vmem, size = 0x10000, scoped, tag = 'input window, operand 0, single buffered']
    #allocation4 [shape = 's32[1]{0}', space=sflag, size = 0x4, scoped, tag = 'scoped memory for la_message_passing_up_attention.1']
    %8 = vsyncpa [#allocation4], 0
    // Predicated region
    $region2: #{la_message_passing_up_attention.1} parent=1 // pred_check
      _
    $region3: #{la_message_passing_up_attention.1} parent=1 // pred_check_branch
      %10 = sbr.rel (0) target = $region5
    $region4: #{la_message_passing_up_attention.1} parent=1 // pred_region
      %s12 = ssub.s32 2048, 2048
      %13 = vsyncadd [#allocation4], %s12
      %s14 = sshll.u32 [#allocation3], 4
      %s15 = int_to_ptr.vmem [resolvable:$true] %s14
      %20 = dma.hbm_to_vmem [thread:$0]  %s0, 2048, %s15, [#allocation4], 128, 128, 8
    $region5: #{la_message_passing_up_attention.1} parent=1 // pred_fallthru
      _
    // Predicated region
    $region6: #{la_message_passing_up_attention.1} parent=1 // pred_check
      _
    $region7: #{la_message_passing_up_attention.1} parent=1 // pred_check_branch
      %22 = sbr.rel (0) target = $region9
    $region8: #{la_message_passing_up_attention.1} parent=1 // pred_region
      _
    $region9: #{la_message_passing_up_attention.1} parent=1 // pred_fallthru
      _
    // Predicated region
    $region10: #{la_message_passing_up_attention.1} parent=1 // pred_check
      _
    $region11: #{la_message_passing_up_attention.1} parent=1 // pred_check_branch
      %24 = sbr.rel (0) target = $region13
    $region12: #{la_message_passing_up_attention.1} parent=1 // pred_region
      _
    $region13: #{la_message_passing_up_attention.1} parent=1 // pred_fallthru
      _
    // Predicated region
    $region14: #{la_message_passing_up_attention.1} parent=1 // pred_check
      _
    $region15: #{la_message_passing_up_attention.1} parent=1 // pred_check_branch
      %26 = sbr.rel (0) target = $region17
    $region16: #{la_message_passing_up_attention.1} parent=1 // pred_region
      %27 = dma.done [#allocation4], 2048
    $region17: #{la_message_passing_up_attention.1} parent=1 // pred_fallthru
      _
    %p28 = scmp.eq.s32.totalorder 0, 0
    // Predicated region
    $region18: #{la_message_passing_up_attention.1} parent=1 // pred_check
      %p29 = pneg %p28
    $region19: #{la_message_passing_up_attention.1} parent=1 // pred_check_branch
      %31 = sbr.rel (%p29) target = $region21
    $region20: #{la_message_passing_up_attention.1} parent=1 // pred_region
      %32 = vst [vmem:[#allocation2] sm:$0xff] 0.0
      %33 = vst [vmem:[#allocation2 + $0x8] sm:$0xff] 0.0
      %34 = vst [vmem:[#allocation2 + $0x10] sm:$0xff] 0.0
      %35 = vst [vmem:[#allocation2 + $0x18] sm:$0xff] 0.0
      %36 = vst [vmem:[#allocation2 + $0x20] sm:$0xff] 0.0
      %37 = vst [vmem:[#allocation2 + $0x28] sm:$0xff] 0.0
      %38 = vst [vmem:[#allocation2 + $0x30] sm:$0xff] 0.0
      %39 = vst [vmem:[#allocation2 + $0x38] sm:$0xff] 0.0
      %40 = vst [vmem:[#allocation2 + $0x40] sm:$0xff] 0.0
      %41 = vst [vmem:[#allocation2 + $0x48] sm:$0xff] 0.0
      %42 = vst [vmem:[#allocation2 + $0x50] sm:$0xff] 0.0
      %43 = vst [vmem:[#allocation2 + $0x58] sm:$0xff] 0.0
      %44 = vst [vmem:[#allocation2 + $0x60] sm:$0xff] 0.0
      %45 = vst [vmem:[#allocation2 + $0x68] sm:$0xff] 0.0
      %46 = vst [vmem:[#allocation2 + $0x70] sm:$0xff] 0.0
      %47 = vst [vmem:[#allocation2 + $0x78] sm:$0xff] 0.0
    $region21: #{la_message_passing_up_attention.1} parent=1 // pred_fallthru
      _
    %v48 = vld [vmem:[#allocation2] sm:$0xff]
    %v49 = vld [vmem:[#allocation2 + $0x8] sm:$0xff]
    %v50 = vld [vmem:[#allocation2 + $0x10] sm:$0xff]
    %v51 = vld [vmem:[#allocation2 + $0x18] sm:$0xff]
    %v52 = vld [vmem:[#allocation2 + $0x20] sm:$0xff]
    %v53 = vld [vmem:[#allocation2 + $0x28] sm:$0xff]
    %v54 = vld [vmem:[#allocation2 + $0x30] sm:$0xff]
    %v55 = vld [vmem:[#allocation2 + $0x38] sm:$0xff]
    %v56 = vld [vmem:[#allocation2 + $0x40] sm:$0xff]
    %v57 = vld [vmem:[#allocation2 + $0x48] sm:$0xff]
    %v58 = vld [vmem:[#allocation2 + $0x50] sm:$0xff]
    %v59 = vld [vmem:[#allocation2 + $0x58] sm:$0xff]
    %v60 = vld [vmem:[#allocation2 + $0x60] sm:$0xff]
    %v61 = vld [vmem:[#allocation2 + $0x68] sm:$0xff]
    %v62 = vld [vmem:[#allocation2 + $0x70] sm:$0xff]
    %v63 = vld [vmem:[#allocation2 + $0x78] sm:$0xff]
    %v64 = vld [vmem:[#allocation3] sm:$0xff]
    %v65 = vld [vmem:[#allocation3 + $0x8] sm:$0xff]
    %v66 = vld [vmem:[#allocation3 + $0x10] sm:$0xff]
    %v67 = vld [vmem:[#allocation3 + $0x18] sm:$0xff]
    %v68 = vld [vmem:[#allocation3 + $0x20] sm:$0xff]
    %v69 = vld [vmem:[#allocation3 + $0x28] sm:$0xff]
    %v70 = vld [vmem:[#allocation3 + $0x30] sm:$0xff]
    %v71 = vld [vmem:[#allocation3 + $0x38] sm:$0xff]
    %v72 = vld [vmem:[#allocation3 + $0x40] sm:$0xff]
    %v73 = vld [vmem:[#allocation3 + $0x48] sm:$0xff]
    %v74 = vld [vmem:[#allocation3 + $0x50] sm:$0xff]
    %v75 = vld [vmem:[#allocation3 + $0x58] sm:$0xff]
    %v76 = vld [vmem:[#allocation3 + $0x60] sm:$0xff]
    %v77 = vld [vmem:[#allocation3 + $0x68] sm:$0xff]
    %v78 = vld [vmem:[#allocation3 + $0x70] sm:$0xff]
    %v79 = vld [vmem:[#allocation3 + $0x78] sm:$0xff]
    %v80 = vld [vmem:[%s1] sm:$0xff]
    %v81 = vld [vmem:[%s1 + $0x8] sm:$0xff]
    %v82 = vld [vmem:[%s1 + $0x10] sm:$0xff]
    %v83 = vld [vmem:[%s1 + $0x18] sm:$0xff]
    %v84 = vld [vmem:[%s1 + $0x20] sm:$0xff]
    %v85 = vld [vmem:[%s1 + $0x28] sm:$0xff]
    %v86 = vld [vmem:[%s1 + $0x30] sm:$0xff]
    %v87 = vld [vmem:[%s1 + $0x38] sm:$0xff]
    %v88 = vld [vmem:[%s1 + $0x40] sm:$0xff]
    %v89 = vld [vmem:[%s1 + $0x48] sm:$0xff]
    %v90 = vld [vmem:[%s1 + $0x50] sm:$0xff]
    %v91 = vld [vmem:[%s1 + $0x58] sm:$0xff]
    %v92 = vld [vmem:[%s1 + $0x60] sm:$0xff]
    %v93 = vld [vmem:[%s1 + $0x68] sm:$0xff]
    %v94 = vld [vmem:[%s1 + $0x70] sm:$0xff]
    %v95 = vld [vmem:[%s1 + $0x78] sm:$0xff]
    %96 = vmatprep.subr.mxu0 0.0
    %97 = vmatpush1.msra.mxu0 %v80
    %98 = vmatprep.subr.mxu0 0.0
    %99 = vmatpush1.msra.mxu0 %v81
    %100 = vmatprep.subr.mxu0 0.0
    %101 = vmatpush1.msra.mxu0 %v82
    %102 = vmatprep.subr.mxu0 0.0
    %103 = vmatpush1.msra.mxu0 %v83
    %104 = vmatprep.subr.mxu0 0.0
    %105 = vmatpush1.msra.mxu0 %v84
    %106 = vmatprep.subr.mxu0 0.0
    %107 = vmatpush1.msra.mxu0 %v85
    %108 = vmatprep.subr.mxu0 0.0
    %109 = vmatpush1.msra.mxu0 %v86
    %110 = vmatprep.subr.mxu0 0.0
    %111 = vmatpush1.msra.mxu0 %v87
    %112 = vmatprep.subr.mxu0 0.0
    %113 = vmatpush1.msra.mxu0 %v88
    %114 = vmatprep.subr.mxu0 0.0
    %115 = vmatpush1.msra.mxu0 %v89
    %116 = vmatprep.subr.mxu0 0.0
    %117 = vmatpush1.msra.mxu0 %v90
    %118 = vmatprep.subr.mxu0 0.0
    %119 = vmatpush1.msra.mxu0 %v91
    %120 = vmatprep.subr.mxu0 0.0
    %121 = vmatpush1.msra.mxu0 %v92
    %122 = vmatprep.subr.mxu0 0.0
    %123 = vmatpush1.msra.mxu0 %v93
    %124 = vmatprep.subr.mxu0 0.0
    %125 = vmatpush1.msra.mxu0 %v94
    %126 = vmatprep.subr.mxu0 0.0
    %127 = vmatpush1.msra.mxu0 %v95
    %128 = vmatprep.subr.mxu0 0.0
    %129 = vmatpush1.msra.mxu0 0.0
    %130 = vmatprep.subr.mxu0 0.0
    %131 = vmatpush1.msra.mxu0 0.0
    %132 = vmatprep.subr.mxu0 0.0
    %133 = vmatpush1.msra.mxu0 0.0
    %134 = vmatprep.subr.mxu0 0.0
    %135 = vmatpush1.msra.mxu0 0.0
    %136 = vmatprep.subr.mxu0 0.0
    %137 = vmatpush1.msra.mxu0 0.0
    %138 = vmatprep.subr.mxu0 0.0
    %139 = vmatpush1.msra.mxu0 0.0
    %140 = vmatprep.subr.mxu0 0.0
    %141 = vmatpush1.msra.mxu0 0.0
    %142 = vmatprep.subr.mxu0 0.0
    %143 = vmatpush1.msra.mxu0 0.0
    %144 = vmatprep.subr.mxu0 0.0
    %145 = vmatpush1.msra.mxu0 0.0
    %146 = vmatprep.subr.mxu0 0.0
    %147 = vmatpush1.msra.mxu0 0.0
    %148 = vmatprep.subr.mxu0 0.0
    %149 = vmatpush1.msra.mxu0 0.0
    %150 = vmatprep.subr.mxu0 0.0
    %151 = vmatpush1.msra.mxu0 0.0
    %152 = vmatprep.subr.mxu0 0.0
    %153 = vmatpush1.msra.mxu0 0.0
    %154 = vmatprep.subr.mxu0 0.0
    %155 = vmatpush1.msra.mxu0 0.0
    %156 = vmatprep.subr.mxu0 0.0
    %157 = vmatpush1.msra.mxu0 0.0
    %158 = vmatprep.subr.mxu0 0.0
    %159 = vmatpush1.msra.mxu0 0.0
    %160 = vmatprep.mubr.f32.mxu0 0.0
    %161 = vmatmul.mubr.f32.gmra.mrb[0].mxu0 %v64
    %v162 = vpop.f32.mrb[0].mxu0
    %v163 = vadd.f32 0.0, %v162
    %v164 = vpop.f32.mrb[0].mxu0
    %165 = vmatprep.mubr.f32.mxu0 0.0
    %166 = vmatmul.mubr.f32.gmra.mrb[0].mxu0 %v65
    %v167 = vpop.f32.mrb[0].mxu0
    %v168 = vadd.f32 0.0, %v167
    %v169 = vpop.f32.mrb[0].mxu0
    %170 = vmatprep.mubr.f32.mxu0 0.0
    %171 = vmatmul.mubr.f32.gmra.mrb[0].mxu0 %v66
    %v172 = vpop.f32.mrb[0].mxu0
    %v173 = vadd.f32 0.0, %v172
    %v174 = vpop.f32.mrb[0].mxu0
    %175 = vmatprep.mubr.f32.mxu0 0.0
    %176 = vmatmul.mubr.f32.gmra.mrb[0].mxu0 %v67
    %v177 = vpop.f32.mrb[0].mxu0
    %v178 = vadd.f32 0.0, %v177
    %v179 = vpop.f32.mrb[0].mxu0
    %180 = vmatprep.mubr.f32.mxu0 0.0
    %181 = vmatmul.mubr.f32.gmra.mrb[0].mxu0 %v68
    %v182 = vpop.f32.mrb[0].mxu0
    %v183 = vadd.f32 0.0, %v182
    %v184 = vpop.f32.mrb[0].mxu0
    %185 = vmatprep.mubr.f32.mxu0 0.0
    %186 = vmatmul.mubr.f32.gmra.mrb[0].mxu0 %v69
    %v187 = vpop.f32.mrb[0].mxu0
    %v188 = vadd.f32 0.0, %v187
    %v189 = vpop.f32.mrb[0].mxu0
    %190 = vmatprep.mubr.f32.mxu0 0.0
    %191 = vmatmul.mubr.f32.gmra.mrb[0].mxu0 %v70
    %v192 = vpop.f32.mrb[0].mxu0
    %v193 = vadd.f32 0.0, %v192
    %v194 = vpop.f32.mrb[0].mxu0
    %195 = vmatprep.mubr.f32.mxu0 0.0
    %196 = vmatmul.mubr.f32.gmra.mrb[0].mxu0 %v71
    %v197 = vpop.f32.mrb[0].mxu0
    %v198 = vadd.f32 0.0, %v197
    %v199 = vpop.f32.mrb[0].mxu0
    %200 = vmatprep.mubr.f32.mxu0 0.0
    %201 = vmatmul.mubr.f32.gmra.mrb[0].mxu0 %v72
    %v202 = vpop.f32.mrb[0].mxu0
    %v203 = vadd.f32 0.0, %v202
    %v204 = vpop.f32.mrb[0].mxu0
    %205 = vmatprep.mubr.f32.mxu0 0.0
    %206 = vmatmul.mubr.f32.gmra.mrb[0].mxu0 %v73
    %v207 = vpop.f32.mrb[0].mxu0
    %v208 = vadd.f32 0.0, %v207
    %v209 = vpop.f32.mrb[0].mxu0
    %210 = vmatprep.mubr.f32.mxu0 0.0
    %211 = vmatmul.mubr.f32.gmra.mrb[0].mxu0 %v74
    %v212 = vpop.f32.mrb[0].mxu0
    %v213 = vadd.f32 0.0, %v212
    %v214 = vpop.f32.mrb[0].mxu0
    %215 = vmatprep.mubr.f32.mxu0 0.0
    %216 = vmatmul.mubr.f32.gmra.mrb[0].mxu0 %v75
    %v217 = vpop.f32.mrb[0].mxu0
    %v218 = vadd.f32 0.0, %v217
    %v219 = vpop.f32.mrb[0].mxu0
    %220 = vmatprep.mubr.f32.mxu0 0.0
    %221 = vmatmul.mubr.f32.gmra.mrb[0].mxu0 %v76
    %v222 = vpop.f32.mrb[0].mxu0
    %v223 = vadd.f32 0.0, %v222
    %v224 = vpop.f32.mrb[0].mxu0
    %225 = vmatprep.mubr.f32.mxu0 0.0
    %226 = vmatmul.mubr.f32.gmra.mrb[0].mxu0 %v77
    %v227 = vpop.f32.mrb[0].mxu0
    %v228 = vadd.f32 0.0, %v227
    %v229 = vpop.f32.mrb[0].mxu0
    %230 = vmatprep.mubr.f32.mxu0 0.0
    %231 = vmatmul.mubr.f32.gmra.mrb[0].mxu0 %v78
    %v232 = vpop.f32.mrb[0].mxu0
    %v233 = vadd.f32 0.0, %v232
    %v234 = vpop.f32.mrb[0].mxu0
    %235 = vmatprep.mubr.f32.mxu0 0.0
    %236 = vmatmul.mubr.f32.gmra.mrb[0].mxu0 %v79
    %v237 = vpop.f32.mrb[0].mxu0
    %v238 = vadd.f32 0.0, %v237
    %v239 = vpop.f32.mrb[0].mxu0
    %240 = vdwg.mxu0
    %v241 = vadd.f32 %v48, %v163
    %v242 = vadd.f32 %v49, %v168
    %v243 = vadd.f32 %v50, %v173
    %v244 = vadd.f32 %v51, %v178
    %v245 = vadd.f32 %v52, %v183
    %v246 = vadd.f32 %v53, %v188
    %v247 = vadd.f32 %v54, %v193
    %v248 = vadd.f32 %v55, %v198
    %v249 = vadd.f32 %v56, %v203
    %v250 = vadd.f32 %v57, %v208
    %v251 = vadd.f32 %v58, %v213
    %v252 = vadd.f32 %v59, %v218
    %v253 = vadd.f32 %v60, %v223
    %v254 = vadd.f32 %v61, %v228
    %v255 = vadd.f32 %v62, %v233
    %v256 = vadd.f32 %v63, %v238
    %257 = vst [vmem:[#allocation2] sm:$0xff] %v241
    %258 = vst [vmem:[#allocation2 + $0x8] sm:$0xff] %v242
    %259 = vst [vmem:[#allocation2 + $0x10] sm:$0xff] %v243
    %260 = vst [vmem:[#allocation2 + $0x18] sm:$0xff] %v244
    %261 = vst [vmem:[#allocation2 + $0x20] sm:$0xff] %v245
    %262 = vst [vmem:[#allocation2 + $0x28] sm:$0xff] %v246
    %263 = vst [vmem:[#allocation2 + $0x30] sm:$0xff] %v247
    %264 = vst [vmem:[#allocation2 + $0x38] sm:$0xff] %v248
    %265 = vst [vmem:[#allocation2 + $0x40] sm:$0xff] %v249
    %266 = vst [vmem:[#allocation2 + $0x48] sm:$0xff] %v250
    %267 = vst [vmem:[#allocation2 + $0x50] sm:$0xff] %v251
    %268 = vst [vmem:[#allocation2 + $0x58] sm:$0xff] %v252
    %269 = vst [vmem:[#allocation2 + $0x60] sm:$0xff] %v253
    %270 = vst [vmem:[#allocation2 + $0x68] sm:$0xff] %v254
    %271 = vst [vmem:[#allocation2 + $0x70] sm:$0xff] %v255
    %272 = vst [vmem:[#allocation2 + $0x78] sm:$0xff] %v256
    // Predicated region
    $region22: #{la_message_passing_up_attention.1} parent=1 // pred_check
      %p273 = pneg %p28
    $region23: #{la_message_passing_up_attention.1} parent=1 // pred_check_branch
      %275 = sbr.rel (%p273) target = $region25
    $region24: #{la_message_passing_up_attention.1} parent=1 // pred_region
      %v276 = vld [vmem:[%s2] sm:$0xff]
      %v277 = vld [vmem:[%s2 + $0x8] sm:$0xff]
      %v278 = vld [vmem:[%s2 + $0x10] sm:$0xff]
      %v279 = vld [vmem:[%s2 + $0x18] sm:$0xff]
      %v280 = vld [vmem:[%s2 + $0x20] sm:$0xff]
      %v281 = vld [vmem:[%s2 + $0x28] sm:$0xff]
      %v282 = vld [vmem:[%s2 + $0x30] sm:$0xff]
      %v283 = vld [vmem:[%s2 + $0x38] sm:$0xff]
      %v284 = vld [vmem:[%s2 + $0x40] sm:$0xff]
      %v285 = vld [vmem:[%s2 + $0x48] sm:$0xff]
      %v286 = vld [vmem:[%s2 + $0x50] sm:$0xff]
      %v287 = vld [vmem:[%s2 + $0x58] sm:$0xff]
      %v288 = vld [vmem:[%s2 + $0x60] sm:$0xff]
      %v289 = vld [vmem:[%s2 + $0x68] sm:$0xff]
      %v290 = vld [vmem:[%s2 + $0x70] sm:$0xff]
      %v291 = vld [vmem:[%s2 + $0x78] sm:$0xff]
      %v292 = vld [vmem:[#allocation2] sm:$0xff]
      %v293 = vld [vmem:[#allocation2 + $0x8] sm:$0xff]
      %v294 = vld [vmem:[#allocation2 + $0x10] sm:$0xff]
      %v295 = vld [vmem:[#allocation2 + $0x18] sm:$0xff]
      %v296 = vld [vmem:[#allocation2 + $0x20] sm:$0xff]
      %v297 = vld [vmem:[#allocation2 + $0x28] sm:$0xff]
      %v298 = vld [vmem:[#allocation2 + $0x30] sm:$0xff]
      %v299 = vld [vmem:[#allocation2 + $0x38] sm:$0xff]
      %v300 = vld [vmem:[#allocation2 + $0x40] sm:$0xff]
      %v301 = vld [vmem:[#allocation2 + $0x48] sm:$0xff]
      %v302 = vld [vmem:[#allocation2 + $0x50] sm:$0xff]
      %v303 = vld [vmem:[#allocation2 + $0x58] sm:$0xff]
      %v304 = vld [vmem:[#allocation2 + $0x60] sm:$0xff]
      %v305 = vld [vmem:[#allocation2 + $0x68] sm:$0xff]
      %v306 = vld [vmem:[#allocation2 + $0x70] sm:$0xff]
      %v307 = vld [vmem:[#allocation2 + $0x78] sm:$0xff]
      %v308 = vadd.f32 %v276, %v292
      %v309 = vadd.f32 %v277, %v293
      %v310 = vadd.f32 %v278, %v294
      %v311 = vadd.f32 %v279, %v295
      %v312 = vadd.f32 %v280, %v296
      %v313 = vadd.f32 %v281, %v297
      %v314 = vadd.f32 %v282, %v298
      %v315 = vadd.f32 %v283, %v299
      %v316 = vadd.f32 %v284, %v300
      %v317 = vadd.f32 %v285, %v301
      %v318 = vadd.f32 %v286, %v302
      %v319 = vadd.f32 %v287, %v303
      %v320 = vadd.f32 %v288, %v304
      %v321 = vadd.f32 %v289, %v305
      %v322 = vadd.f32 %v290, %v306
      %v323 = vadd.f32 %v291, %v307
      %324 = vst [vmem:[%s3] sm:$0xff] %v308
      %325 = vst [vmem:[%s3 + $0x8] sm:$0xff] %v309
      %326 = vst [vmem:[%s3 + $0x10] sm:$0xff] %v310
      %327 = vst [vmem:[%s3 + $0x18] sm:$0xff] %v311
      %328 = vst [vmem:[%s3 + $0x20] sm:$0xff] %v312
      %329 = vst [vmem:[%s3 + $0x28] sm:$0xff] %v313
      %330 = vst [vmem:[%s3 + $0x30] sm:$0xff] %v314
      %331 = vst [vmem:[%s3 + $0x38] sm:$0xff] %v315
      %332 = vst [vmem:[%s3 + $0x40] sm:$0xff] %v316
      %333 = vst [vmem:[%s3 + $0x48] sm:$0xff] %v317
      %334 = vst [vmem:[%s3 + $0x50] sm:$0xff] %v318
      %335 = vst [vmem:[%s3 + $0x58] sm:$0xff] %v319
      %336 = vst [vmem:[%s3 + $0x60] sm:$0xff] %v320
      %337 = vst [vmem:[%s3 + $0x68] sm:$0xff] %v321
      %338 = vst [vmem:[%s3 + $0x70] sm:$0xff] %v322
      %339 = vst [vmem:[%s3 + $0x78] sm:$0xff] %v323
    $region25: #{la_message_passing_up_attention.1} parent=1 // pred_fallthru
      _
    // Predicated region
    $region26: #{la_message_passing_up_attention.1} parent=1 // pred_check
      _
    $region27: #{la_message_passing_up_attention.1} parent=1 // pred_check_branch
      %341 = sbr.rel (0) target = $region29
    $region28: #{la_message_passing_up_attention.1} parent=1 // pred_region
      _
    $region29: #{la_message_passing_up_attention.1} parent=1 // pred_fallthru
      _
    // Predicated region
    $region30: #{la_message_passing_up_attention.1} parent=1 // pred_check
      _
    $region31: #{la_message_passing_up_attention.1} parent=1 // pred_check_branch
      %343 = sbr.rel (0) target = $region33
    $region32: #{la_message_passing_up_attention.1} parent=1 // pred_region
      _
    $region33: #{la_message_passing_up_attention.1} parent=1 // pred_fallthru
      _
    %344 = vsyncpa [#allocation4], 1

</llo_original>
